<compile_context>
chip_gen: v5e
topology: v5e:2x2
jax: 0.10.0
libtpu: 0.0.40
codegen_flags: <defaults>
</compile_context>

<pallas_src>
import math
from functools import partial

import jax
import jax.numpy as jnp
import numpy as np
from jax.experimental import pallas as pl
from jax.experimental.pallas import tpu as pltpu


def attention_kernel(xq_ref, xkv_ref, wq_ref, wk_ref, wv_ref, wproj_ref, bproj_ref,
                     o_ref, q_sc, m_sc, l_sc, acc_sc, *, num_heads, scale):
    """Grid step = (batch b, q-tile qi, kv-tile ki); kv axis is the reduction axis.

    xq_ref   : (1, TQ, C)  bf16   query-side token tile
    xkv_ref  : (1, TK, C)  bf16   key/value-side token tile
    wq/wk/wv : (H, C, D)   bf16   per-head projection weights (in, out)
    wproj_ref: (H, D, C)   bf16   per-head output-projection weights
    bproj_ref: (1, C)      f32    output-projection bias
    o_ref    : (1, TQ, C)         output tile (written on last kv step)
    q_sc     : (H, TQ, D)  bf16   scaled queries (computed at ki == 0)
    m_sc/l_sc: (H, TQ, 1)  f32    online-softmax running max / denom
    acc_sc   : (H, TQ, D)  f32    online-softmax running numerator
    """
    ki = pl.program_id(2)
    H = num_heads
    TQ = q_sc.shape[1]
    D = q_sc.shape[2]
    C = xq_ref.shape[2]
    TK = xkv_ref.shape[1]

    # ---- init: compute (scaled) queries once per (b, qi); reset softmax state ----
    @pl.when(ki == 0)
    def _init():
        xq = xq_ref[0]                                           # (TQ, C) bf16
        xqb = jnp.broadcast_to(xq[None], (H, TQ, C))             # head-batched lhs
        q = jnp.einsum('hqc,hcd->hqd', xqb, wq_ref[...],
                       preferred_element_type=jnp.float32)       # (H, TQ, D) f32
        q_sc[...] = (q * scale).astype(q_sc.dtype)
        m_sc[...] = jnp.full(m_sc.shape, -jnp.inf, dtype=m_sc.dtype)
        l_sc[...] = jnp.zeros(l_sc.shape, dtype=l_sc.dtype)
        acc_sc[...] = jnp.zeros(acc_sc.shape, dtype=acc_sc.dtype)

    # ---- per kv-tile: project k/v, online-softmax update ----
    xkv = xkv_ref[0]                                             # (TK, C) bf16
    xkvb = jnp.broadcast_to(xkv[None], (H, TK, C))
    k = jnp.einsum('hkc,hcd->hkd', xkvb, wk_ref[...],
                   preferred_element_type=jnp.float32).astype(jnp.bfloat16)  # (H, TK, D)
    v = jnp.einsum('hkc,hcd->hkd', xkvb, wv_ref[...],
                   preferred_element_type=jnp.float32).astype(jnp.bfloat16)  # (H, TK, D)

    s = jnp.einsum('hqd,hkd->hqk', q_sc[...], k,
                   preferred_element_type=jnp.float32)           # (H, TQ, TK) f32

    m_prev = m_sc[...]
    m_new = jnp.maximum(m_prev, s.max(axis=-1, keepdims=True))
    alpha = jnp.exp(m_prev - m_new)                              # rescale of old state
    p = jnp.exp(s - m_new)                                       # (H, TQ, TK)
    l_sc[...] = alpha * l_sc[...] + p.sum(axis=-1, keepdims=True)
    acc_sc[...] = alpha * acc_sc[...] + jnp.einsum(
        'hqk,hkd->hqd', p.astype(jnp.bfloat16), v,
        preferred_element_type=jnp.float32)
    m_sc[...] = m_new

    # ---- finalize: normalize, per-head output projection, sum over heads, bias ----
    @pl.when(ki == pl.num_programs(2) - 1)
    def _finalize():
        o = acc_sc[...] * pl.reciprocal(l_sc[...], approx=True)  # (H, TQ, D) f32
        ctx = jnp.einsum('hqd,hdc->hqc', o.astype(jnp.bfloat16), wproj_ref[...],
                         preferred_element_type=jnp.float32)     # (H, TQ, C)
        out = jnp.sum(ctx, axis=0) + bproj_ref[...]              # (TQ, C) + (1, C)
        o_ref[0] = out.astype(o_ref.dtype)


def _pick_tile(n: int, preferred: int = 128) -> int:
    # Lane/sublane-friendly tile that evenly divides N (falls back to full N).
    return preferred if (n >= preferred and n % preferred == 0) else n


def attention_forward(x, wqkv, wproj, bproj, *, num_heads):
    """x: (B, N, C); wqkv: (C, 3C); wproj: (C, C); bproj: (C,). qkv_bias=False."""
    B, N, C = x.shape
    assert C % num_heads == 0
    H = num_heads
    D = C // H
    scale = D ** (-0.5)

    # Pre-arrange weights per head (done once in XLA, outside the kernel), bf16 for MXU.
    w3 = wqkv.reshape(C, 3, H, D).transpose(1, 2, 0, 3)          # (3, H, C, D)
    wq_h = w3[0].astype(jnp.bfloat16)                            # (H, C, D)
    wk_h = w3[1].astype(jnp.bfloat16)
    wv_h = w3[2].astype(jnp.bfloat16)
    wproj_h = wproj.reshape(H, D, C).astype(jnp.bfloat16)        # (H, D, C)
    bproj2 = bproj.reshape(1, C).astype(jnp.float32)
    x_bf = x.astype(jnp.bfloat16)

    TQ = _pick_tile(N)
    TK = _pick_tile(N)
    grid = (B, N // TQ, N // TK)

    kernel = partial(attention_kernel, num_heads=H, scale=scale)
    # TODO(synk): output channel dim C (<128 here) gives masked stores; padding C to a
    # multiple of 128 at the wrapper would make stores lane-dense for real ViT widths.
    return pl.pallas_call(
        kernel,
        out_shape=jax.ShapeDtypeStruct((B, N, C), x.dtype),
        grid_spec=pltpu.PrefetchScalarGridSpec(
            num_scalar_prefetch=0,
            grid=grid,
            in_specs=[
                pl.BlockSpec((1, TQ, C), lambda b, qi, ki: (b, qi, 0)),   # x (query tile)
                pl.BlockSpec((1, TK, C), lambda b, qi, ki: (b, ki, 0)),   # x (kv tile)
                pl.BlockSpec((H, C, D), lambda b, qi, ki: (0, 0, 0)),     # wq (resident)
                pl.BlockSpec((H, C, D), lambda b, qi, ki: (0, 0, 0)),     # wk (resident)
                pl.BlockSpec((H, C, D), lambda b, qi, ki: (0, 0, 0)),     # wv (resident)
                pl.BlockSpec((H, D, C), lambda b, qi, ki: (0, 0, 0)),     # wproj (resident)
                pl.BlockSpec((1, C), lambda b, qi, ki: (0, 0)),           # bias (resident)
            ],
            out_specs=pl.BlockSpec((1, TQ, C), lambda b, qi, ki: (b, qi, 0)),
            scratch_shapes=[
                pltpu.VMEM((H, TQ, D), jnp.bfloat16),   # scaled q
                pltpu.VMEM((H, TQ, 1), jnp.float32),    # running max m
                pltpu.VMEM((H, TQ, 1), jnp.float32),    # running denom l
                pltpu.VMEM((H, TQ, D), jnp.float32),    # running numerator acc
            ],
        ),
        compiler_params=pltpu.CompilerParams(
            dimension_semantics=("parallel", "parallel", "arbitrary")),
    )(x_bf, x_bf, wq_h, wk_h, wv_h, wproj_h, bproj2)


def attention_reference(x, wqkv, wproj, bproj, *, num_heads):
    """Plain-JAX (f32) mirror of the PyTorch forward, for correctness checking."""
    B, N, C = x.shape
    D = C // num_heads
    scale = D ** (-0.5)
    qkv = x @ wqkv                                               # (B, N, 3C)
    qkv = qkv.reshape(B, N, 3, num_heads, D).transpose(2, 0, 3, 1, 4)
    q, k, v = qkv[0], qkv[1], qkv[2]                             # (B, H, N, D)
    attn = (q @ jnp.swapaxes(k, -2, -1)) * scale                 # (B, H, N, N)
    attn = jax.nn.softmax(attn, axis=-1)
    out = (attn @ v).transpose(0, 2, 1, 3).reshape(B, N, C)
    return out @ wproj + bproj


if __name__ == "__main__":
    # Small shapes consistent with the module: B=2, N=8 tokens, C=32 dim, 4 heads.
    B, N, C = 2, 8, 32
    num_heads = 4

    key = jax.random.PRNGKey(0)
    kx, kqkv, kproj, kb = jax.random.split(key, 4)

    x = jax.random.normal(kx, (B, N, C), dtype=jnp.float32)

    # PyTorch Linear stores W as (out, in); we pass W.T = (in, out). qkv_bias=False.
    bound = 1.0 / math.sqrt(C)
    w_qkv_torch = jax.random.uniform(kqkv, (3 * C, C), minval=-bound, maxval=bound,
                                     dtype=jnp.float32)
    w_proj_torch = jax.random.uniform(kproj, (C, C), minval=-bound, maxval=bound,
                                      dtype=jnp.float32)
    b_proj = jax.random.uniform(kb, (C,), minval=-bound, maxval=bound,
                                dtype=jnp.float32)

    wqkv = w_qkv_torch.T          # (C, 3C)
    wproj = w_proj_torch.T        # (C, C)

    out = attention_forward(x, wqkv, wproj, b_proj, num_heads=num_heads)
    out = jax.block_until_ready(out)

    ref = attention_reference(x, wqkv, wproj, b_proj, num_heads=num_heads)
    # bf16 MXU inputs + approx reciprocal -> small expected deltas vs the f32 reference.
    np.testing.assert_allclose(np.asarray(out), np.asarray(ref), rtol=3e-2, atol=3e-2)

    print("KERNEL_OK")
</pallas_src>

<mosaic_0001>
module attributes {stable_mosaic.version = 11 : i64} {
  func.func @attention_kernel(%arg0: i32, %arg1: i32, %arg2: i32, %arg3: memref<1x8x32xbf16, #tpu.memory_space<vmem>>, %arg4: memref<1x8x32xbf16, #tpu.memory_space<vmem>>, %arg5: memref<4x32x8xbf16, #tpu.memory_space<vmem>>, %arg6: memref<4x32x8xbf16, #tpu.memory_space<vmem>>, %arg7: memref<4x32x8xbf16, #tpu.memory_space<vmem>>, %arg8: memref<4x8x32xbf16, #tpu.memory_space<vmem>>, %arg9: memref<1x32xf32, #tpu.memory_space<vmem>>, %arg10: memref<1x8x32xf32, #tpu.memory_space<vmem>>, %arg11: memref<4x8x8xbf16, #tpu.memory_space<vmem>>, %arg12: memref<4x8x1xf32, #tpu.memory_space<vmem>>, %arg13: memref<4x8x1xf32, #tpu.memory_space<vmem>>, %arg14: memref<4x8x8xf32, #tpu.memory_space<vmem>>) attributes {dimension_semantics = [#tpu.dimension_semantics<parallel>, #tpu.dimension_semantics<parallel>, #tpu.dimension_semantics<arbitrary>], iteration_bounds = array<i64: 2, 1, 1>, scalar_prefetch = 0 : i64, scratch_operands = 4 : i64, tpu.core_type = #tpu.core_type<tc>, window_params = [{transform_indices = @transform_0, window_bounds = array<i64: 1, 8, 32>}, {transform_indices = @transform_1, window_bounds = array<i64: 1, 8, 32>}, {pipeline_mode = #tpu.pipeline_mode<synchronous>, transform_indices = @transform_2, window_bounds = array<i64: 4, 32, 8>}, {pipeline_mode = #tpu.pipeline_mode<synchronous>, transform_indices = @transform_3, window_bounds = array<i64: 4, 32, 8>}, {pipeline_mode = #tpu.pipeline_mode<synchronous>, transform_indices = @transform_4, window_bounds = array<i64: 4, 32, 8>}, {pipeline_mode = #tpu.pipeline_mode<synchronous>, transform_indices = @transform_5, window_bounds = array<i64: 4, 8, 32>}, {pipeline_mode = #tpu.pipeline_mode<synchronous>, transform_indices = @transform_6, window_bounds = array<i64: 1, 32>}, {transform_indices = @transform_7, window_bounds = array<i64: 1, 8, 32>}]} {
    %c0_i32 = arith.constant 0 : i32
    %0 = arith.cmpi eq, %arg2, %c0_i32 : i32
    %1 = arith.extui %0 : i1 to i32
    %c0_i32_0 = arith.constant 0 : i32
    %2 = arith.cmpi ne, %1, %c0_i32_0 : i32
    scf.if %2 {
      %c0_37 = arith.constant 0 : index
      %c0_38 = arith.constant 0 : index
      %c0_39 = arith.constant 0 : index
      %42 = vector.load %arg3[%c0_37, %c0_38, %c0_39] : memref<1x8x32xbf16, #tpu.memory_space<vmem>>, vector<1x8x32xbf16>
      %43 = vector.shape_cast %42 : vector<1x8x32xbf16> to vector<8x32xbf16>
      %44 = vector.shape_cast %43 : vector<8x32xbf16> to vector<1x8x32xbf16>
      %45 = vector.shape_cast %44 : vector<1x8x32xbf16> to vector<1x8x32xbf16>
      %46 = vector.broadcast %45 : vector<1x8x32xbf16> to vector<4x8x32xbf16>
      %c0_40 = arith.constant 0 : index
      %c0_41 = arith.constant 0 : index
      %c0_42 = arith.constant 0 : index
      %47 = vector.load %arg5[%c0_40, %c0_41, %c0_42] : memref<4x32x8xbf16, #tpu.memory_space<vmem>>, vector<4x32x8xbf16>
      "tpu.trace_start"() <{level = 10 : i32, message = "hqc,hcd->hqd"}> : () -> ()
      %cst_43 = arith.constant dense<0.000000e+00> : vector<4x8x8xf32>
      %48 = tpu.matmul %46, %47, %cst_43 {dimension_numbers = #tpu.dot_dimension_numbers<[2], [1], [1], [2], [0, 0, 0, 1, 1, 2], [0], [0]>} : vector<4x8x32xbf16>, vector<4x32x8xbf16>, vector<4x8x8xf32> -> vector<4x8x8xf32>
      "tpu.trace_stop"() : () -> ()
      %cst_44 = arith.constant 0.353553385 : f32
      %49 = vector.broadcast %cst_44 : f32 to vector<4x8x8xf32>
      %50 = arith.mulf %48, %49 : vector<4x8x8xf32>
      %51 = arith.truncf %50 : vector<4x8x8xf32> to vector<4x8x8xbf16>
      %c0_45 = arith.constant 0 : index
      %c0_46 = arith.constant 0 : index
      %c0_47 = arith.constant 0 : index
      %52 = vector.load %arg11[%c0_45, %c0_46, %c0_47] : memref<4x8x8xbf16, #tpu.memory_space<vmem>>, vector<4x8x8xbf16>
      tpu.vector_store %arg11[%c0_45, %c0_46, %c0_47], %51 {strides = array<i32>} : memref<4x8x8xbf16, #tpu.memory_space<vmem>>, vector<4x8x8xbf16>,
      %cst_48 = arith.constant 0xFF800000 : f32
      %53 = vector.broadcast %cst_48 : f32 to vector<4x8x1xf32>
      %c0_49 = arith.constant 0 : index
      %c0_50 = arith.constant 0 : index
      %c0_51 = arith.constant 0 : index
      %54 = vector.load %arg12[%c0_49, %c0_50, %c0_51] : memref<4x8x1xf32, #tpu.memory_space<vmem>>, vector<4x8x1xf32>
      tpu.vector_store %arg12[%c0_49, %c0_50, %c0_51], %53 {strides = array<i32>} : memref<4x8x1xf32, #tpu.memory_space<vmem>>, vector<4x8x1xf32>,
      %cst_52 = arith.constant 0.000000e+00 : f32
      %55 = vector.broadcast %cst_52 : f32 to vector<4x8x1xf32>
      %c0_53 = arith.constant 0 : index
      %c0_54 = arith.constant 0 : index
      %c0_55 = arith.constant 0 : index
      %56 = vector.load %arg13[%c0_53, %c0_54, %c0_55] : memref<4x8x1xf32, #tpu.memory_space<vmem>>, vector<4x8x1xf32>
      tpu.vector_store %arg13[%c0_53, %c0_54, %c0_55], %55 {strides = array<i32>} : memref<4x8x1xf32, #tpu.memory_space<vmem>>, vector<4x8x1xf32>,
      %cst_56 = arith.constant 0.000000e+00 : f32
      %57 = vector.broadcast %cst_56 : f32 to vector<4x8x8xf32>
      %c0_57 = arith.constant 0 : index
      %c0_58 = arith.constant 0 : index
      %c0_59 = arith.constant 0 : index
      %58 = vector.load %arg14[%c0_57, %c0_58, %c0_59] : memref<4x8x8xf32, #tpu.memory_space<vmem>>, vector<4x8x8xf32>
      tpu.vector_store %arg14[%c0_57, %c0_58, %c0_59], %57 {strides = array<i32>} : memref<4x8x8xf32, #tpu.memory_space<vmem>>, vector<4x8x8xf32>,
    } else {
    }
    %c0 = arith.constant 0 : index
    %c0_1 = arith.constant 0 : index
    %c0_2 = arith.constant 0 : index
    %3 = vector.load %arg4[%c0, %c0_1, %c0_2] : memref<1x8x32xbf16, #tpu.memory_space<vmem>>, vector<1x8x32xbf16>
    %4 = vector.shape_cast %3 : vector<1x8x32xbf16> to vector<8x32xbf16>
    %5 = vector.shape_cast %4 : vector<8x32xbf16> to vector<1x8x32xbf16>
    %6 = vector.shape_cast %5 : vector<1x8x32xbf16> to vector<1x8x32xbf16>
    %7 = vector.broadcast %6 : vector<1x8x32xbf16> to vector<4x8x32xbf16>
    %c0_3 = arith.constant 0 : index
    %c0_4 = arith.constant 0 : index
    %c0_5 = arith.constant 0 : index
    %8 = vector.load %arg6[%c0_3, %c0_4, %c0_5] : memref<4x32x8xbf16, #tpu.memory_space<vmem>>, vector<4x32x8xbf16>
    "tpu.trace_start"() <{level = 10 : i32, message = "hkc,hcd->hkd"}> : () -> ()
    %cst = arith.constant dense<0.000000e+00> : vector<4x8x8xf32>
    %9 = tpu.matmul %7, %8, %cst {dimension_numbers = #tpu.dot_dimension_numbers<[2], [1], [1], [2], [0, 0, 0, 1, 1, 2], [0], [0]>} : vector<4x8x32xbf16>, vector<4x32x8xbf16>, vector<4x8x8xf32> -> vector<4x8x8xf32>
    "tpu.trace_stop"() : () -> ()
    %10 = arith.truncf %9 : vector<4x8x8xf32> to vector<4x8x8xbf16>
    %c0_6 = arith.constant 0 : index
    %c0_7 = arith.constant 0 : index
    %c0_8 = arith.constant 0 : index
    %11 = vector.load %arg7[%c0_6, %c0_7, %c0_8] : memref<4x32x8xbf16, #tpu.memory_space<vmem>>, vector<4x32x8xbf16>
    "tpu.trace_start"() <{level = 10 : i32, message = "hkc,hcd->hkd"}> : () -> ()
    %cst_9 = arith.constant dense<0.000000e+00> : vector<4x8x8xf32>
    %12 = tpu.matmul %7, %11, %cst_9 {dimension_numbers = #tpu.dot_dimension_numbers<[2], [1], [1], [2], [0, 0, 0, 1, 1, 2], [0], [0]>} : vector<4x8x32xbf16>, vector<4x32x8xbf16>, vector<4x8x8xf32> -> vector<4x8x8xf32>
    "tpu.trace_stop"() : () -> ()
    %13 = arith.truncf %12 : vector<4x8x8xf32> to vector<4x8x8xbf16>
    %c0_10 = arith.constant 0 : index
    %c0_11 = arith.constant 0 : index
    %c0_12 = arith.constant 0 : index
    %14 = vector.load %arg11[%c0_10, %c0_11, %c0_12] : memref<4x8x8xbf16, #tpu.memory_space<vmem>>, vector<4x8x8xbf16>
    "tpu.trace_start"() <{level = 10 : i32, message = "hqd,hkd->hqk"}> : () -> ()
    %cst_13 = arith.constant dense<0.000000e+00> : vector<4x8x8xf32>
    %15 = tpu.matmul %14, %10, %cst_13 {dimension_numbers = #tpu.dot_dimension_numbers<[2], [2], [1], [1], [0, 0, 0, 1, 1, 1], [0], [0]>} : vector<4x8x8xbf16>, vector<4x8x8xbf16>, vector<4x8x8xf32> -> vector<4x8x8xf32>
    "tpu.trace_stop"() : () -> ()
    %c0_14 = arith.constant 0 : index
    %c0_15 = arith.constant 0 : index
    %c0_16 = arith.constant 0 : index
    %16 = vector.load %arg12[%c0_14, %c0_15, %c0_16] : memref<4x8x1xf32, #tpu.memory_space<vmem>>, vector<4x8x1xf32>
    %cst_17 = arith.constant dense<0xFF800000> : vector<4x8xf32>
    %17 = vector.multi_reduction <maximumf>, %15, %cst_17 [2] : vector<4x8x8xf32> to vector<4x8xf32>
    %18 = vector.shape_cast %17 : vector<4x8xf32> to vector<4x8x1xf32>
    %19 = arith.maximumf %16, %18 : vector<4x8x1xf32>
    %20 = arith.subf %16, %19 : vector<4x8x1xf32>
    %21 = math.exp %20 : vector<4x8x1xf32>
    %22 = vector.broadcast %19 : vector<4x8x1xf32> to vector<4x8x8xf32>
    %23 = arith.subf %15, %22 : vector<4x8x8xf32>
    %24 = math.exp %23 : vector<4x8x8xf32>
    %c0_18 = arith.constant 0 : index
    %c0_19 = arith.constant 0 : index
    %c0_20 = arith.constant 0 : index
    %25 = vector.load %arg13[%c0_18, %c0_19, %c0_20] : memref<4x8x1xf32, #tpu.memory_space<vmem>>, vector<4x8x1xf32>
    %26 = arith.mulf %21, %25 : vector<4x8x1xf32>
    %cst_21 = arith.constant dense<0.000000e+00> : vector<4x8xf32>
    %27 = vector.multi_reduction <add>, %24, %cst_21 [2] : vector<4x8x8xf32> to vector<4x8xf32>
    %28 = vector.shape_cast %27 : vector<4x8xf32> to vector<4x8x1xf32>
    %29 = arith.addf %26, %28 : vector<4x8x1xf32>
    %c0_22 = arith.constant 0 : index
    %c0_23 = arith.constant 0 : index
    %c0_24 = arith.constant 0 : index
    %30 = vector.load %arg13[%c0_22, %c0_23, %c0_24] : memref<4x8x1xf32, #tpu.memory_space<vmem>>, vector<4x8x1xf32>
    tpu.vector_store %arg13[%c0_22, %c0_23, %c0_24], %29 {strides = array<i32>} : memref<4x8x1xf32, #tpu.memory_space<vmem>>, vector<4x8x1xf32>,
    %c0_25 = arith.constant 0 : index
    %c0_26 = arith.constant 0 : index
    %c0_27 = arith.constant 0 : index
    %31 = vector.load %arg14[%c0_25, %c0_26, %c0_27] : memref<4x8x8xf32, #tpu.memory_space<vmem>>, vector<4x8x8xf32>
    %32 = vector.broadcast %21 : vector<4x8x1xf32> to vector<4x8x8xf32>
    %33 = arith.mulf %32, %31 : vector<4x8x8xf32>
    %34 = arith.truncf %24 : vector<4x8x8xf32> to vector<4x8x8xbf16>
    "tpu.trace_start"() <{level = 10 : i32, message = "hqk,hkd->hqd"}> : () -> ()
    %cst_28 = arith.constant dense<0.000000e+00> : vector<4x8x8xf32>
    %35 = tpu.matmul %34, %13, %cst_28 {dimension_numbers = #tpu.dot_dimension_numbers<[2], [1], [1], [2], [0, 0, 0, 1, 1, 2], [0], [0]>} : vector<4x8x8xbf16>, vector<4x8x8xbf16>, vector<4x8x8xf32> -> vector<4x8x8xf32>
    "tpu.trace_stop"() : () -> ()
    %36 = arith.addf %33, %35 : vector<4x8x8xf32>
    %c0_29 = arith.constant 0 : index
    %c0_30 = arith.constant 0 : index
    %c0_31 = arith.constant 0 : index
    %37 = vector.load %arg14[%c0_29, %c0_30, %c0_31] : memref<4x8x8xf32, #tpu.memory_space<vmem>>, vector<4x8x8xf32>
    tpu.vector_store %arg14[%c0_29, %c0_30, %c0_31], %36 {strides = array<i32>} : memref<4x8x8xf32, #tpu.memory_space<vmem>>, vector<4x8x8xf32>,
    %c0_32 = arith.constant 0 : index
    %c0_33 = arith.constant 0 : index
    %c0_34 = arith.constant 0 : index
    %38 = vector.load %arg12[%c0_32, %c0_33, %c0_34] : memref<4x8x1xf32, #tpu.memory_space<vmem>>, vector<4x8x1xf32>
    tpu.vector_store %arg12[%c0_32, %c0_33, %c0_34], %19 {strides = array<i32>} : memref<4x8x1xf32, #tpu.memory_space<vmem>>, vector<4x8x1xf32>,
    %c0_i32_35 = arith.constant 0 : i32
    %39 = arith.cmpi eq, %arg2, %c0_i32_35 : i32
    %40 = arith.extui %39 : i1 to i32
    %c0_i32_36 = arith.constant 0 : i32
    %41 = arith.cmpi ne, %40, %c0_i32_36 : i32
    scf.if %41 {
      %c0_37 = arith.constant 0 : index
      %c0_38 = arith.constant 0 : index
      %c0_39 = arith.constant 0 : index
      %42 = vector.load %arg14[%c0_37, %c0_38, %c0_39] : memref<4x8x8xf32, #tpu.memory_space<vmem>>, vector<4x8x8xf32>
      %c0_40 = arith.constant 0 : index
      %c0_41 = arith.constant 0 : index
      %c0_42 = arith.constant 0 : index
      %43 = vector.load %arg13[%c0_40, %c0_41, %c0_42] : memref<4x8x1xf32, #tpu.memory_space<vmem>>, vector<4x8x1xf32>
      %44 = tpu.reciprocal %43 {approx = true} : vector<4x8x1xf32> -> vector<4x8x1xf32>
      %45 = vector.broadcast %44 : vector<4x8x1xf32> to vector<4x8x8xf32>
      %46 = arith.mulf %42, %45 : vector<4x8x8xf32>
      %47 = arith.truncf %46 : vector<4x8x8xf32> to vector<4x8x8xbf16>
      %c0_43 = arith.constant 0 : index
      %c0_44 = arith.constant 0 : index
      %c0_45 = arith.constant 0 : index
      %48 = vector.load %arg8[%c0_43, %c0_44, %c0_45] : memref<4x8x32xbf16, #tpu.memory_space<vmem>>, vector<4x8x32xbf16>
      "tpu.trace_start"() <{level = 10 : i32, message = "hqd,hdc->hqc"}> : () -> ()
      %cst_46 = arith.constant dense<0.000000e+00> : vector<4x8x32xf32>
      %49 = tpu.matmul %47, %48, %cst_46 {dimension_numbers = #tpu.dot_dimension_numbers<[2], [1], [1], [2], [0, 0, 0, 1, 1, 2], [0], [0]>} : vector<4x8x8xbf16>, vector<4x8x32xbf16>, vector<4x8x32xf32> -> vector<4x8x32xf32>
      "tpu.trace_stop"() : () -> ()
      %cst_47 = arith.constant dense<0.000000e+00> : vector<8x32xf32>
      %50 = vector.multi_reduction <add>, %49, %cst_47 [0] : vector<4x8x32xf32> to vector<8x32xf32>
      %c0_48 = arith.constant 0 : index
      %c0_49 = arith.constant 0 : index
      %51 = vector.load %arg9[%c0_48, %c0_49] : memref<1x32xf32, #tpu.memory_space<vmem>>, vector<1x32xf32>
      %52 = vector.broadcast %51 : vector<1x32xf32> to vector<8x32xf32>
      %53 = arith.addf %50, %52 : vector<8x32xf32>
      %c0_50 = arith.constant 0 : index
      %c0_51 = arith.constant 0 : index
      %c0_52 = arith.constant 0 : index
      %54 = vector.load %arg10[%c0_50, %c0_51, %c0_52] : memref<1x8x32xf32, #tpu.memory_space<vmem>>, vector<1x8x32xf32>
      %55 = vector.shape_cast %54 : vector<1x8x32xf32> to vector<8x32xf32>
      %56 = vector.shape_cast %53 : vector<8x32xf32> to vector<1x8x32xf32>
      tpu.vector_store %arg10[%c0_50, %c0_51, %c0_52], %56 {strides = array<i32>} : memref<1x8x32xf32, #tpu.memory_space<vmem>>, vector<1x8x32xf32>,
    } else {
    }
    return
  }
  func.func @transform_0(%arg0: i32, %arg1: i32, %arg2: i32) -> (i32, i32, i32) {
    %c0_i32 = arith.constant 0 : i32
    %c0_i32_0 = arith.constant 0 : i32
    return %arg0, %arg1, %c0_i32 : i32, i32, i32
  }
  func.func @transform_1(%arg0: i32, %arg1: i32, %arg2: i32) -> (i32, i32, i32) {
    %c0_i32 = arith.constant 0 : i32
    %c0_i32_0 = arith.constant 0 : i32
    return %arg0, %arg2, %c0_i32 : i32, i32, i32
  }
  func.func @transform_2(%arg0: i32, %arg1: i32, %arg2: i32) -> (i32, i32, i32) {
    %c0_i32 = arith.constant 0 : i32
    %c0_i32_0 = arith.constant 0 : i32
    %c0_i32_1 = arith.constant 0 : i32
    %c0_i32_2 = arith.constant 0 : i32
    return %c0_i32, %c0_i32_0, %c0_i32_1 : i32, i32, i32
  }
  func.func @transform_3(%arg0: i32, %arg1: i32, %arg2: i32) -> (i32, i32, i32) {
    %c0_i32 = arith.constant 0 : i32
    %c0_i32_0 = arith.constant 0 : i32
    %c0_i32_1 = arith.constant 0 : i32
    %c0_i32_2 = arith.constant 0 : i32
    return %c0_i32, %c0_i32_0, %c0_i32_1 : i32, i32, i32
  }
  func.func @transform_4(%arg0: i32, %arg1: i32, %arg2: i32) -> (i32, i32, i32) {
    %c0_i32 = arith.constant 0 : i32
    %c0_i32_0 = arith.constant 0 : i32
    %c0_i32_1 = arith.constant 0 : i32
    %c0_i32_2 = arith.constant 0 : i32
    return %c0_i32, %c0_i32_0, %c0_i32_1 : i32, i32, i32
  }
  func.func @transform_5(%arg0: i32, %arg1: i32, %arg2: i32) -> (i32, i32, i32) {
    %c0_i32 = arith.constant 0 : i32
    %c0_i32_0 = arith.constant 0 : i32
    %c0_i32_1 = arith.constant 0 : i32
    %c0_i32_2 = arith.constant 0 : i32
    return %c0_i32, %c0_i32_0, %c0_i32_1 : i32, i32, i32
  }
  func.func @transform_6(%arg0: i32, %arg1: i32, %arg2: i32) -> (i32, i32) {
    %c0_i32 = arith.constant 0 : i32
    %c0_i32_0 = arith.constant 0 : i32
    %c0_i32_1 = arith.constant 0 : i32
    return %c0_i32, %c0_i32_0 : i32, i32
  }
  func.func @transform_7(%arg0: i32, %arg1: i32, %arg2: i32) -> (i32, i32, i32) {
    %c0_i32 = arith.constant 0 : i32
    %c0_i32_0 = arith.constant 0 : i32
    return %arg0, %arg1, %c0_i32 : i32, i32, i32
  }
}

</mosaic_0001>

<llo_original>
// kernel: tpu_custom_call.1
$region0: #{tpu_custom_call.1}
  #allocation0 [shape = 'u32[]', space=smem, size = 0x4, offset = 0x4, fixed_abs, tag = 'smem constant byte address 0x4 - core index']
  #allocation1 [shape = 'u32[72,128]{1,0:T(1,128)}', space=vmem, size = 0x9000, scoped, tag = 'internal scratch']
  #allocation2 [shape = 'bf16[4,8,8]{2,1,0:T(8,128)(2,1)}', space=vmem, size = 0x2000, scoped, tag = 'scratch operand']
  #allocation3 [shape = 'f32[4,8,1]{2,1,0:T(8,128)}', space=vmem, size = 0x4000, scoped, tag = 'scratch operand']
  #allocation4 [shape = 'f32[4,8,1]{2,1,0:T(8,128)}', space=vmem, size = 0x4000, scoped, tag = 'scratch operand']
  #allocation5 [shape = 'f32[4,8,8]{2,1,0:T(8,128)}', space=vmem, size = 0x4000, scoped, tag = 'scratch operand']
  %s0 = inlined_call_operand.vmem [shape: bf16[2,8,32], index: 0, kind: input, shape index: {}]
  %s1 = inlined_call_operand.vmem [shape: bf16[2,8,32], index: 1, kind: input, shape index: {}]
  %s2 = inlined_call_operand.vmem [shape: bf16[4,32,8], index: 2, kind: input, shape index: {}]
  %s3 = inlined_call_operand.vmem [shape: bf16[4,32,8], index: 3, kind: input, shape index: {}]
  %s4 = inlined_call_operand.vmem [shape: bf16[4,32,8], index: 4, kind: input, shape index: {}]
  %s5 = inlined_call_operand.vmem [shape: bf16[4,8,32], index: 5, kind: input, shape index: {}]
  %s6 = inlined_call_operand.vmem [shape: f32[1,32], index: 6, kind: input, shape index: {}]
  %s7 = inlined_call_operand.hbm [shape: f32[2,8,32], index: 7, kind: output, shape index: {}]
  %s8 = sld [smem:[#allocation0]]
  $region69: #{tpu_custom_call.1} parent=0
    _
  %s10 = ssub.s32 1, %s8
  %s11 = scalar_select 0, %s10, %s8
  $region1: #{tpu_custom_call.1} parent=0
    #allocation6 [shape = 'u8[8192]{0}', space=vmem, size = 0x2000, scoped, tag = 'output window, operand 0']
    #allocation7 [shape = 's32[2]{0}', space=sflag, size = 0x8, scoped, tag = 'scoped memory for tpu_custom_call.1']
    %12 = vsyncpa [#allocation7], 0
    %s13 = scalar_lea.sflag [#allocation7], 1
    %14 = vsyncpa %s13, 0
    loop: start=0, step=1, limit=4
    $region2: #{tpu_custom_call.1} parent=1 // loop_pre_header
      _
    $region3: #{tpu_custom_call.1} parent=1 // loop_header
      %s16 = sphi 0, %s20
      %p17 = scmp.ge.s32.totalorder %s16, 4
      %s23 = sphi 0, %s42
      %s24 = sphi 0, %s38
      %s25 = sphi 0, %s34
      %s26 = sphi 0, %s23
      %s27 = sphi 0, %s24
      %s28 = sphi 0, %s25
      %s29 = sphi 0, %s26
      %s30 = sphi 0, %s27
      %s31 = sphi 0, %s28
      %s47 = sphi 0, %s49
      %s50 = sphi 0, %s47
      %s51 = sphi 0, %s50
      %s67 = sphi 0, %s51
      %s75 = sphi 0, %s77
      %s78 = sphi 0, %s75
      %s79 = sphi 0, %s78
      %s95 = sphi 0, %s79
      %s99 = sphi 0, %s99
      %s101 = sphi 0, %s99
      %s102 = sphi 0, %s101
      %s116 = sphi 0, %s102
      %s120 = sphi 0, %s120
      %s122 = sphi 0, %s120
      %s123 = sphi 0, %s122
      %s137 = sphi 0, %s123
      %s141 = sphi 0, %s141
      %s143 = sphi 0, %s141
      %s144 = sphi 0, %s143
      %s158 = sphi 0, %s144
      %s162 = sphi 0, %s162
      %s164 = sphi 0, %s162
      %s165 = sphi 0, %s164
      %s179 = sphi 0, %s165
      %s183 = sphi 0, %s183
      %s185 = sphi 0, %s183
      %s186 = sphi 0, %s185
      %s200 = sphi 0, %s186
      %s208 = sphi 0, %s210
      %s211 = sphi 0, %s208
      %s212 = sphi 0, %s211
      %s228 = sphi 0, %s212
    $region4: #{tpu_custom_call.1} parent=1 // loop_header_branch
      %19 = sbr.rel (%p17) target = $region8
    $region5: #{tpu_custom_call.1} parent=1 // loop_body
      %s21 = ssub.s32 %s16, 1
      %s22 = ssub.s32 %s16, 2
      %s32 = sadd.s32 1, %s25
      %p33 = scmp.ge.s32.totalorder %s32, 1
      %s34 = scalar_select %p33, 0, %s32
      %s35 = sadd.s32 1, %s24
      %s36 = scalar_select %p33, %s35, %s24
      %p37 = scmp.ge.s32.totalorder %s36, 1
      %s38 = scalar_select %p37, 0, %s36
      %s39 = sadd.s32 1, %s23
      %s40 = scalar_select %p37, %s39, %s23
      %p41 = scmp.ge.s32.totalorder %s40, 2
      %s42 = scalar_select %p41, 0, %s40
      %s43 = ssub.s32 %s23, %s42
      %s44 = ssub.s32 %s24, %s38
      %s45 = sor.u32 %s43, %s44
      %p46 = scmp.eq.s32.totalorder %s45, 0
      %s48 = sadd.s32 %s47, 1
      %s49 = scalar_select %p46, %s47, %s48
      %p52 = pneg %p46
      %p53 = scmp.eq.s32.totalorder %s16, 1
      %p54 = por %p52, %p53
      %p55 = scmp.ne.s32.totalorder %s47, %s50
      %p56 = scmp.eq.s32.totalorder %s16, 0
      %p57 = por %p55, %p56
      %p58 = scmp.ne.s32.totalorder %s47, %s50
      %p59 = scmp.eq.s32.totalorder %s21, 1
      %p60 = por %p58, %p59
      %p61 = scmp.ne.s32.totalorder %s50, %s51
      %p62 = scmp.eq.s32.totalorder %s21, 0
      %p63 = por %p61, %p62
      %p64 = scmp.ne.s32.totalorder %s50, %s51
      %p65 = scmp.eq.s32.totalorder %s22, 1
      %p66 = por %p64, %p65
      %p68 = scmp.ne.s32.totalorder %s51, %s67
      %p69 = scmp.eq.s32.totalorder %s22, 0
      %p70 = por %p68, %p69
      %s71 = ssub.s32 %s23, %s42
      %s72 = ssub.s32 %s25, %s34
      %s73 = sor.u32 %s71, %s72
      %p74 = scmp.eq.s32.totalorder %s73, 0
      %s76 = sadd.s32 %s75, 1
      %s77 = scalar_select %p74, %s75, %s76
      %p80 = pneg %p74
      %p81 = scmp.eq.s32.totalorder %s16, 1
      %p82 = por %p80, %p81
      %p83 = scmp.ne.s32.totalorder %s75, %s78
      %p84 = scmp.eq.s32.totalorder %s16, 0
      %p85 = por %p83, %p84
      %p86 = scmp.ne.s32.totalorder %s75, %s78
      %p87 = scmp.eq.s32.totalorder %s21, 1
      %p88 = por %p86, %p87
      %p89 = scmp.ne.s32.totalorder %s78, %s79
      %p90 = scmp.eq.s32.totalorder %s21, 0
      %p91 = por %p89, %p90
      %p92 = scmp.ne.s32.totalorder %s78, %s79
      %p93 = scmp.eq.s32.totalorder %s22, 1
      %p94 = por %p92, %p93
      %p96 = scmp.ne.s32.totalorder %s79, %s95
      %p97 = scmp.eq.s32.totalorder %s22, 0
      %p98 = por %p96, %p97
      %s100 = sadd.s32 %s99, 1
      %p103 = scmp.eq.s32.totalorder %s16, 1
      %p104 = scmp.ne.s32.totalorder %s99, %s101
      %p105 = scmp.eq.s32.totalorder %s16, 0
      %p106 = por %p104, %p105
      %p107 = scmp.ne.s32.totalorder %s99, %s101
      %p108 = scmp.eq.s32.totalorder %s21, 1
      %p109 = por %p107, %p108
      %p110 = scmp.ne.s32.totalorder %s101, %s102
      %p111 = scmp.eq.s32.totalorder %s21, 0
      %p112 = por %p110, %p111
      %p113 = scmp.ne.s32.totalorder %s101, %s102
      %p114 = scmp.eq.s32.totalorder %s22, 1
      %p115 = por %p113, %p114
      %p117 = scmp.ne.s32.totalorder %s102, %s116
      %p118 = scmp.eq.s32.totalorder %s22, 0
      %p119 = por %p117, %p118
      %s121 = sadd.s32 %s120, 1
      %p124 = scmp.eq.s32.totalorder %s16, 1
      %p125 = scmp.ne.s32.totalorder %s120, %s122
      %p126 = scmp.eq.s32.totalorder %s16, 0
      %p127 = por %p125, %p126
      %p128 = scmp.ne.s32.totalorder %s120, %s122
      %p129 = scmp.eq.s32.totalorder %s21, 1
      %p130 = por %p128, %p129
      %p131 = scmp.ne.s32.totalorder %s122, %s123
      %p132 = scmp.eq.s32.totalorder %s21, 0
      %p133 = por %p131, %p132
      %p134 = scmp.ne.s32.totalorder %s122, %s123
      %p135 = scmp.eq.s32.totalorder %s22, 1
      %p136 = por %p134, %p135
      %p138 = scmp.ne.s32.totalorder %s123, %s137
      %p139 = scmp.eq.s32.totalorder %s22, 0
      %p140 = por %p138, %p139
      %s142 = sadd.s32 %s141, 1
      %p145 = scmp.eq.s32.totalorder %s16, 1
      %p146 = scmp.ne.s32.totalorder %s141, %s143
      %p147 = scmp.eq.s32.totalorder %s16, 0
      %p148 = por %p146, %p147
      %p149 = scmp.ne.s32.totalorder %s141, %s143
      %p150 = scmp.eq.s32.totalorder %s21, 1
      %p151 = por %p149, %p150
      %p152 = scmp.ne.s32.totalorder %s143, %s144
      %p153 = scmp.eq.s32.totalorder %s21, 0
      %p154 = por %p152, %p153
      %p155 = scmp.ne.s32.totalorder %s143, %s144
      %p156 = scmp.eq.s32.totalorder %s22, 1
      %p157 = por %p155, %p156
      %p159 = scmp.ne.s32.totalorder %s144, %s158
      %p160 = scmp.eq.s32.totalorder %s22, 0
      %p161 = por %p159, %p160
      %s163 = sadd.s32 %s162, 1
      %p166 = scmp.eq.s32.totalorder %s16, 1
      %p167 = scmp.ne.s32.totalorder %s162, %s164
      %p168 = scmp.eq.s32.totalorder %s16, 0
      %p169 = por %p167, %p168
      %p170 = scmp.ne.s32.totalorder %s162, %s164
      %p171 = scmp.eq.s32.totalorder %s21, 1
      %p172 = por %p170, %p171
      %p173 = scmp.ne.s32.totalorder %s164, %s165
      %p174 = scmp.eq.s32.totalorder %s21, 0
      %p175 = por %p173, %p174
      %p176 = scmp.ne.s32.totalorder %s164, %s165
      %p177 = scmp.eq.s32.totalorder %s22, 1
      %p178 = por %p176, %p177
      %p180 = scmp.ne.s32.totalorder %s165, %s179
      %p181 = scmp.eq.s32.totalorder %s22, 0
      %p182 = por %p180, %p181
      %s184 = sadd.s32 %s183, 1
      %p187 = scmp.eq.s32.totalorder %s16, 1
      %p188 = scmp.ne.s32.totalorder %s183, %s185
      %p189 = scmp.eq.s32.totalorder %s16, 0
      %p190 = por %p188, %p189
      %p191 = scmp.ne.s32.totalorder %s183, %s185
      %p192 = scmp.eq.s32.totalorder %s21, 1
      %p193 = por %p191, %p192
      %p194 = scmp.ne.s32.totalorder %s185, %s186
      %p195 = scmp.eq.s32.totalorder %s21, 0
      %p196 = por %p194, %p195
      %p197 = scmp.ne.s32.totalorder %s185, %s186
      %p198 = scmp.eq.s32.totalorder %s22, 1
      %p199 = por %p197, %p198
      %p201 = scmp.ne.s32.totalorder %s186, %s200
      %p202 = scmp.eq.s32.totalorder %s22, 0
      %p203 = por %p201, %p202
      %s204 = ssub.s32 %s23, %s42
      %s205 = ssub.s32 %s24, %s38
      %s206 = sor.u32 %s204, %s205
      %p207 = scmp.eq.s32.totalorder %s206, 0
      %s209 = sadd.s32 %s208, 1
      %s210 = scalar_select %p207, %s208, %s209
      %p213 = pneg %p207
      %p214 = scmp.eq.s32.totalorder %s16, 1
      %p215 = por %p213, %p214
      %p216 = scmp.ne.s32.totalorder %s208, %s211
      %p217 = scmp.eq.s32.totalorder %s16, 0
      %p218 = por %p216, %p217
      %p219 = scmp.ne.s32.totalorder %s208, %s211
      %p220 = scmp.eq.s32.totalorder %s21, 1
      %p221 = por %p219, %p220
      %p222 = scmp.ne.s32.totalorder %s211, %s212
      %p223 = scmp.eq.s32.totalorder %s21, 0
      %p224 = por %p222, %p223
      %p225 = scmp.ne.s32.totalorder %s211, %s212
      %p226 = scmp.eq.s32.totalorder %s22, 1
      %p227 = por %p225, %p226
      %p229 = scmp.ne.s32.totalorder %s212, %s228
      %p230 = scmp.eq.s32.totalorder %s22, 0
      %p231 = por %p229, %p230
      %p232 = scmp.le.s32.totalorder 1, %s16
      %p233 = scmp.lt.s32.totalorder %s16, 3
      %p234 = pnand %p232, %p233
      %p235 = pneg %p234
      // Predicated region
      $region9: #{tpu_custom_call.1} parent=5 // pred_check
        _
      $region10: #{tpu_custom_call.1} parent=5 // pred_check_branch
        %237 = sbr.rel (%p234) target = $region12
      $region11: #{tpu_custom_call.1} parent=5 // pred_region
        %s238 = ssub.s32 %s16, 1
        // Predicated region
        $region13: #{tpu_custom_call.1} parent=11 // pred_check
          %p239 = pneg %p112
        $region14: #{tpu_custom_call.1} parent=11 // pred_check_branch
          %241 = sbr.rel (%p239) target = $region16
        $region15: #{tpu_custom_call.1} parent=11 // pred_region
          _
        $region16: #{tpu_custom_call.1} parent=11 // pred_fallthru
          _
        // Predicated region
        $region17: #{tpu_custom_call.1} parent=11 // pred_check
          %p242 = pneg %p133
        $region18: #{tpu_custom_call.1} parent=11 // pred_check_branch
          %244 = sbr.rel (%p242) target = $region20
        $region19: #{tpu_custom_call.1} parent=11 // pred_region
          _
        $region20: #{tpu_custom_call.1} parent=11 // pred_fallthru
          _
        // Predicated region
        $region21: #{tpu_custom_call.1} parent=11 // pred_check
          %p245 = pneg %p154
        $region22: #{tpu_custom_call.1} parent=11 // pred_check_branch
          %247 = sbr.rel (%p245) target = $region24
        $region23: #{tpu_custom_call.1} parent=11 // pred_region
          _
        $region24: #{tpu_custom_call.1} parent=11 // pred_fallthru
          _
        // Predicated region
        $region25: #{tpu_custom_call.1} parent=11 // pred_check
          %p248 = pneg %p175
        $region26: #{tpu_custom_call.1} parent=11 // pred_check_branch
          %250 = sbr.rel (%p248) target = $region28
        $region27: #{tpu_custom_call.1} parent=11 // pred_region
          _
        $region28: #{tpu_custom_call.1} parent=11 // pred_fallthru
          _
        // Predicated region
        $region29: #{tpu_custom_call.1} parent=11 // pred_check
          %p251 = pneg %p196
        $region30: #{tpu_custom_call.1} parent=11 // pred_check_branch
          %253 = sbr.rel (%p251) target = $region32
        $region31: #{tpu_custom_call.1} parent=11 // pred_region
          _
        $region32: #{tpu_custom_call.1} parent=11 // pred_fallthru
          _
      $region12: #{tpu_custom_call.1} parent=5 // pred_fallthru
        _
      %p254 = scmp.lt.s32.totalorder %s16, 2
      // Predicated region
      $region33: #{tpu_custom_call.1} parent=5 // pred_check
        %p255 = pneg %p254
      $region34: #{tpu_custom_call.1} parent=5 // pred_check_branch
        %257 = sbr.rel (%p255) target = $region36
      $region35: #{tpu_custom_call.1} parent=5 // pred_region
        // Predicated region
        $region37: #{tpu_custom_call.1} parent=35 // pred_check
          %p258 = pneg %p57
        $region38: #{tpu_custom_call.1} parent=35 // pred_check_branch
          %260 = sbr.rel (%p258) target = $region40
        $region39: #{tpu_custom_call.1} parent=35 // pred_region
          %p261 = scmp.lt.s32.totalorder %s23, 1
          %s262 = scalar_select %p261, %s23, 1
          %p263 = scmp.lt.s32.totalorder %s24, 0
          %s264 = scalar_select %p263, %s24, 0
          %s265 = sadd.s32 %s264, %s262
          %s266 = smul.addr %s265, 4
          %s267 = scalar_lea.vmem %s0, %s266
        $region40: #{tpu_custom_call.1} parent=35 // pred_fallthru
          _
        // Predicated region
        $region41: #{tpu_custom_call.1} parent=35 // pred_check
          %p268 = pneg %p85
        $region42: #{tpu_custom_call.1} parent=35 // pred_check_branch
          %270 = sbr.rel (%p268) target = $region44
        $region43: #{tpu_custom_call.1} parent=35 // pred_region
          %p271 = scmp.lt.s32.totalorder %s23, 1
          %s272 = scalar_select %p271, %s23, 1
          %p273 = scmp.lt.s32.totalorder %s25, 0
          %s274 = scalar_select %p273, %s25, 0
          %s275 = sadd.s32 %s274, %s272
          %s276 = smul.addr %s275, 4
          %s277 = scalar_lea.vmem %s1, %s276
        $region44: #{tpu_custom_call.1} parent=35 // pred_fallthru
          _
      $region36: #{tpu_custom_call.1} parent=5 // pred_fallthru
        _
      %p278 = scmp.le.s32.totalorder 1, %s16
      %p279 = scmp.lt.s32.totalorder %s16, 3
      %p280 = pnand %p278, %p279
      %p281 = pneg %p280
      // Predicated region
      $region45: #{tpu_custom_call.1} parent=5 // pred_check
        _
      $region46: #{tpu_custom_call.1} parent=5 // pred_check_branch
        %283 = sbr.rel (%p280) target = $region48
      $region47: #{tpu_custom_call.1} parent=5 // pred_region
        %s284 = ssub.s32 %s16, 1
        %p285 = scmp.lt.s32.totalorder %s26, 1
        %s286 = scalar_select %p285, %s26, 1
        %p287 = scmp.lt.s32.totalorder %s27, 0
        %s288 = scalar_select %p287, %s27, 0
        %s289 = sadd.s32 %s288, %s286
        %s290 = smul.addr %s289, 4
        %s291 = scalar_lea.vmem %s0, %s290
        %p292 = pneg %p63
        %p293 = pneg %p60
        %p294 = scmp.lt.s32.totalorder %s26, 1
        %s295 = scalar_select %p294, %s26, 1
        %p296 = scmp.lt.s32.totalorder %s28, 0
        %s297 = scalar_select %p296, %s28, 0
        %s298 = sadd.s32 %s297, %s295
        %s299 = smul.addr %s298, 4
        %s300 = scalar_lea.vmem %s1, %s299
        %p301 = pneg %p91
        %p302 = pneg %p88
        %p303 = pneg %p112
        %p304 = pneg %p109
        %p305 = pneg %p133
        %p306 = pneg %p130
        %p307 = pneg %p154
        %p308 = pneg %p151
        %p309 = pneg %p175
        %p310 = pneg %p172
        %p311 = pneg %p196
        %p312 = pneg %p193
        %p313 = pneg %p224
        %p314 = pneg %p221
        %s315 = sand.u32 %s211, 1
        %s316 = scalar_lea.sflag [#allocation7], %s315
        %s317 = sand.u32 %s211, 1
        %s318 = smul.addr %s317, 8
        %s319 = scalar_lea.vmem [#allocation6], %s318
        %p320 = scmp.lt.s32.totalorder %s26, 1
        %s321 = scalar_select %p320, %s26, 1
        %p322 = scmp.lt.s32.totalorder %s27, 0
        %s323 = scalar_select %p322, %s27, 0
        %s324 = sadd.s32 %s323, %s321
        %s325 = smul.addr %s324, 4
        %s326 = scalar_lea.vmem %s0, %s325
        %p327 = scmp.lt.s32.totalorder %s26, 1
        %s328 = scalar_select %p327, %s26, 1
        %p329 = scmp.lt.s32.totalorder %s28, 0
        %s330 = scalar_select %p329, %s28, 0
        %s331 = sadd.s32 %s330, %s328
        %s332 = smul.addr %s331, 4
        %s333 = scalar_lea.vmem %s1, %s332
        %p335 = scmp.eq.s32.totalorder %s28, 0
        // Predicated region
        $region49: #{tpu_custom_call.1} parent=47 // pred_check
          %p336 = pneg %p335
        $region50: #{tpu_custom_call.1} parent=47 // pred_check_branch
          %338 = sbr.rel (%p336) target = $region52
        $region51: #{tpu_custom_call.1} parent=47 // pred_region
          %v339 = vld [vmem:[%s326] sm:$0xf]
          %v340 = vld [vmem:[%s2] sm:$0xf]
          %v341 = vld [vmem:[%s2 + $0x4] sm:$0xf]
          %v342 = vld [vmem:[%s2 + $0x8] sm:$0xf]
          %v343 = vld [vmem:[%s2 + $0xc] sm:$0xf]
          %v344 = vld [vmem:[%s2 + $0x10] sm:$0xf]
          %v345 = vld [vmem:[%s2 + $0x14] sm:$0xf]
          %v346 = vld [vmem:[%s2 + $0x18] sm:$0xf]
          %v347 = vld [vmem:[%s2 + $0x1c] sm:$0xf]
          %v348 = vld [vmem:[%s2 + $0x20] sm:$0xf]
          %v349 = vld [vmem:[%s2 + $0x24] sm:$0xf]
          %v350 = vld [vmem:[%s2 + $0x28] sm:$0xf]
          %v351 = vld [vmem:[%s2 + $0x2c] sm:$0xf]
          %v352 = vld [vmem:[%s2 + $0x30] sm:$0xf]
          %v353 = vld [vmem:[%s2 + $0x34] sm:$0xf]
          %v354 = vld [vmem:[%s2 + $0x38] sm:$0xf]
          %v355 = vld [vmem:[%s2 + $0x3c] sm:$0xf]
          %v360 = vunpack.c.l.b16 %v340
          %v361 = vunpack.c.l.b16 %v341
          %v362 = vunpack.c.l.b16 %v342
          %v363 = vunpack.c.l.b16 %v343
          %v364 = vpack.c.b16 %v361, %v360
          %v365 = vpack.c.b16 %v363, %v362
          %vm368 = vcmask 261120
          %v370 = vsel %vm368, %v339, 0
          %372 = vmatpush.bf16.msra.mxu0 0
          %373 = vmatpush.bf16.msra.mxu0 0
          %374 = vmatpush.bf16.msra.mxu0 0
          %375 = vmatpush.bf16.msra.mxu0 0
          %376 = vmatpush.bf16.msra.mxu0 0
          %377 = vmatpush.bf16.msra.mxu0 0
          %378 = vmatpush.bf16.msra.mxu0 %v365
          %379 = vmatpush.bf16.msra.mxu0 %v364
          %380 = vmatmul.bf16.gmra.mxu0 %v370
          %v381 = vpop.f32.mrf.mxu0
          %v382 = vadd.f32 0.0, %v381
          %v383 = vpop.f32.mrf.mxu0
          %384 = vdwg.mxu0
          %v389 = vunpack.c.l.b16 %v344
          %v390 = vunpack.c.l.b16 %v345
          %v391 = vunpack.c.l.b16 %v346
          %v392 = vunpack.c.l.b16 %v347
          %v393 = vpack.c.b16 %v390, %v389
          %v394 = vpack.c.b16 %v392, %v391
          %397 = vmatpush.bf16.msra.mxu0 0
          %398 = vmatpush.bf16.msra.mxu0 0
          %399 = vmatpush.bf16.msra.mxu0 0
          %400 = vmatpush.bf16.msra.mxu0 0
          %401 = vmatpush.bf16.msra.mxu0 0
          %402 = vmatpush.bf16.msra.mxu0 0
          %403 = vmatpush.bf16.msra.mxu0 %v394
          %404 = vmatpush.bf16.msra.mxu0 %v393
          %405 = vmatmul.bf16.gmra.mxu0 %v370
          %v406 = vpop.f32.mrf.mxu0
          %v407 = vadd.f32 0.0, %v406
          %v408 = vpop.f32.mrf.mxu0
          %409 = vdwg.mxu0
          %v414 = vunpack.c.l.b16 %v348
          %v415 = vunpack.c.l.b16 %v349
          %v416 = vunpack.c.l.b16 %v350
          %v417 = vunpack.c.l.b16 %v351
          %v418 = vpack.c.b16 %v415, %v414
          %v419 = vpack.c.b16 %v417, %v416
          %422 = vmatpush.bf16.msra.mxu0 0
          %423 = vmatpush.bf16.msra.mxu0 0
          %424 = vmatpush.bf16.msra.mxu0 0
          %425 = vmatpush.bf16.msra.mxu0 0
          %426 = vmatpush.bf16.msra.mxu0 0
          %427 = vmatpush.bf16.msra.mxu0 0
          %428 = vmatpush.bf16.msra.mxu0 %v419
          %429 = vmatpush.bf16.msra.mxu0 %v418
          %430 = vmatmul.bf16.gmra.mxu0 %v370
          %v431 = vpop.f32.mrf.mxu0
          %v432 = vadd.f32 0.0, %v431
          %v433 = vpop.f32.mrf.mxu0
          %434 = vdwg.mxu0
          %v439 = vunpack.c.l.b16 %v352
          %v440 = vunpack.c.l.b16 %v353
          %v441 = vunpack.c.l.b16 %v354
          %v442 = vunpack.c.l.b16 %v355
          %v443 = vpack.c.b16 %v440, %v439
          %v444 = vpack.c.b16 %v442, %v441
          %447 = vmatpush.bf16.msra.mxu0 0
          %448 = vmatpush.bf16.msra.mxu0 0
          %449 = vmatpush.bf16.msra.mxu0 0
          %450 = vmatpush.bf16.msra.mxu0 0
          %451 = vmatpush.bf16.msra.mxu0 0
          %452 = vmatpush.bf16.msra.mxu0 0
          %453 = vmatpush.bf16.msra.mxu0 %v444
          %454 = vmatpush.bf16.msra.mxu0 %v443
          %455 = vmatmul.bf16.gmra.mxu0 %v370
          %v456 = vpop.f32.mrf.mxu0
          %v457 = vadd.f32 0.0, %v456
          %v458 = vpop.f32.mrf.mxu0
          %459 = vdwg.mxu0
          %v460 = vmul.f32 %v382, 0.35355338
          %v461 = vmul.f32 %v407, 0.35355338
          %v462 = vmul.f32 %v432, 0.35355338
          %v463 = vmul.f32 %v457, 0.35355338
          %v464 = vpack.c.bf16 %v460, %v460
          %v465 = vpack.c.bf16 %v461, %v461
          %v466 = vpack.c.bf16 %v462, %v462
          %v467 = vpack.c.bf16 %v463, %v463
          %vm468 = vcmask 60416
          %469 = vst.msk [vmem:[#allocation2] sm:$0xf] %vm468, %v464
          %470 = vst.msk [vmem:[#allocation2 + $0x4] sm:$0xf] %vm468, %v465
          %471 = vst.msk [vmem:[#allocation2 + $0x8] sm:$0xf] %vm468, %v466
          %472 = vst.msk [vmem:[#allocation2 + $0xc] sm:$0xf] %vm468, %v467
          %vm473 = vcmask 7168
          %474 = vst.msk [vmem:[#allocation3] sm:$0xff] %vm473, -inf
          %475 = vst.msk [vmem:[#allocation3 + $0x8] sm:$0xff] %vm473, -inf
          %476 = vst.msk [vmem:[#allocation3 + $0x10] sm:$0xff] %vm473, -inf
          %477 = vst.msk [vmem:[#allocation3 + $0x18] sm:$0xff] %vm473, -inf
          %478 = vst.msk [vmem:[#allocation4] sm:$0xff] %vm473, 0.0
          %479 = vst.msk [vmem:[#allocation4 + $0x8] sm:$0xff] %vm473, 0.0
          %480 = vst.msk [vmem:[#allocation4 + $0x10] sm:$0xff] %vm473, 0.0
          %481 = vst.msk [vmem:[#allocation4 + $0x18] sm:$0xff] %vm473, 0.0
          %vm482 = vcmask 64512
          %483 = vst.msk [vmem:[#allocation5] sm:$0xff] %vm482, 0.0
          %484 = vst.msk [vmem:[#allocation5 + $0x8] sm:$0xff] %vm482, 0.0
          %485 = vst.msk [vmem:[#allocation5 + $0x10] sm:$0xff] %vm482, 0.0
          %486 = vst.msk [vmem:[#allocation5 + $0x18] sm:$0xff] %vm482, 0.0
        $region52: #{tpu_custom_call.1} parent=47 // pred_fallthru
          _
        %v487 = vld [vmem:[%s333] sm:$0xf]
        %v488 = vld [vmem:[%s3] sm:$0xf]
        %v489 = vld [vmem:[%s3 + $0x4] sm:$0xf]
        %v490 = vld [vmem:[%s3 + $0x8] sm:$0xf]
        %v491 = vld [vmem:[%s3 + $0xc] sm:$0xf]
        %v492 = vld [vmem:[%s3 + $0x10] sm:$0xf]
        %v493 = vld [vmem:[%s3 + $0x14] sm:$0xf]
        %v494 = vld [vmem:[%s3 + $0x18] sm:$0xf]
        %v495 = vld [vmem:[%s3 + $0x1c] sm:$0xf]
        %v496 = vld [vmem:[%s3 + $0x20] sm:$0xf]
        %v497 = vld [vmem:[%s3 + $0x24] sm:$0xf]
        %v498 = vld [vmem:[%s3 + $0x28] sm:$0xf]
        %v499 = vld [vmem:[%s3 + $0x2c] sm:$0xf]
        %v500 = vld [vmem:[%s3 + $0x30] sm:$0xf]
        %v501 = vld [vmem:[%s3 + $0x34] sm:$0xf]
        %v502 = vld [vmem:[%s3 + $0x38] sm:$0xf]
        %v503 = vld [vmem:[%s3 + $0x3c] sm:$0xf]
        %v508 = vunpack.c.l.b16 %v488
        %v509 = vunpack.c.l.b16 %v489
        %v510 = vunpack.c.l.b16 %v490
        %v511 = vunpack.c.l.b16 %v491
        %v512 = vpack.c.b16 %v509, %v508
        %v513 = vpack.c.b16 %v511, %v510
        %vm516 = vcmask 261120
        %v518 = vsel %vm516, %v487, 0
        %520 = vmatpush.bf16.msra.mxu0 0
        %521 = vmatpush.bf16.msra.mxu0 0
        %522 = vmatpush.bf16.msra.mxu0 0
        %523 = vmatpush.bf16.msra.mxu0 0
        %524 = vmatpush.bf16.msra.mxu0 0
        %525 = vmatpush.bf16.msra.mxu0 0
        %526 = vmatpush.bf16.msra.mxu0 %v513
        %527 = vmatpush.bf16.msra.mxu0 %v512
        %528 = vmatmul.bf16.gmra.mxu0 %v518
        %v529 = vpop.f32.mrf.mxu0
        %v530 = vadd.f32 0.0, %v529
        %v531 = vpop.f32.mrf.mxu0
        %532 = vdwg.mxu0
        %v537 = vunpack.c.l.b16 %v492
        %v538 = vunpack.c.l.b16 %v493
        %v539 = vunpack.c.l.b16 %v494
        %v540 = vunpack.c.l.b16 %v495
        %v541 = vpack.c.b16 %v538, %v537
        %v542 = vpack.c.b16 %v540, %v539
        %545 = vmatpush.bf16.msra.mxu0 0
        %546 = vmatpush.bf16.msra.mxu0 0
        %547 = vmatpush.bf16.msra.mxu0 0
        %548 = vmatpush.bf16.msra.mxu0 0
        %549 = vmatpush.bf16.msra.mxu0 0
        %550 = vmatpush.bf16.msra.mxu0 0
        %551 = vmatpush.bf16.msra.mxu0 %v542
        %552 = vmatpush.bf16.msra.mxu0 %v541
        %553 = vmatmul.bf16.gmra.mxu0 %v518
        %v554 = vpop.f32.mrf.mxu0
        %v555 = vadd.f32 0.0, %v554
        %v556 = vpop.f32.mrf.mxu0
        %557 = vdwg.mxu0
        %v562 = vunpack.c.l.b16 %v496
        %v563 = vunpack.c.l.b16 %v497
        %v564 = vunpack.c.l.b16 %v498
        %v565 = vunpack.c.l.b16 %v499
        %v566 = vpack.c.b16 %v563, %v562
        %v567 = vpack.c.b16 %v565, %v564
        %570 = vmatpush.bf16.msra.mxu0 0
        %571 = vmatpush.bf16.msra.mxu0 0
        %572 = vmatpush.bf16.msra.mxu0 0
        %573 = vmatpush.bf16.msra.mxu0 0
        %574 = vmatpush.bf16.msra.mxu0 0
        %575 = vmatpush.bf16.msra.mxu0 0
        %576 = vmatpush.bf16.msra.mxu0 %v567
        %577 = vmatpush.bf16.msra.mxu0 %v566
        %578 = vmatmul.bf16.gmra.mxu0 %v518
        %v579 = vpop.f32.mrf.mxu0
        %v580 = vadd.f32 0.0, %v579
        %v581 = vpop.f32.mrf.mxu0
        %582 = vdwg.mxu0
        %v587 = vunpack.c.l.b16 %v500
        %v588 = vunpack.c.l.b16 %v501
        %v589 = vunpack.c.l.b16 %v502
        %v590 = vunpack.c.l.b16 %v503
        %v591 = vpack.c.b16 %v588, %v587
        %v592 = vpack.c.b16 %v590, %v589
        %595 = vmatpush.bf16.msra.mxu0 0
        %596 = vmatpush.bf16.msra.mxu0 0
        %597 = vmatpush.bf16.msra.mxu0 0
        %598 = vmatpush.bf16.msra.mxu0 0
        %599 = vmatpush.bf16.msra.mxu0 0
        %600 = vmatpush.bf16.msra.mxu0 0
        %601 = vmatpush.bf16.msra.mxu0 %v592
        %602 = vmatpush.bf16.msra.mxu0 %v591
        %603 = vmatmul.bf16.gmra.mxu0 %v518
        %v604 = vpop.f32.mrf.mxu0
        %v605 = vadd.f32 0.0, %v604
        %v606 = vpop.f32.mrf.mxu0
        %607 = vdwg.mxu0
        %v608 = vpack.c.bf16 %v530, %v530
        %v609 = vpack.c.bf16 %v555, %v555
        %v610 = vpack.c.bf16 %v580, %v580
        %v611 = vpack.c.bf16 %v605, %v605
        %v612 = vld [vmem:[%s4] sm:$0xf]
        %v613 = vld [vmem:[%s4 + $0x4] sm:$0xf]
        %v614 = vld [vmem:[%s4 + $0x8] sm:$0xf]
        %v615 = vld [vmem:[%s4 + $0xc] sm:$0xf]
        %v616 = vld [vmem:[%s4 + $0x10] sm:$0xf]
        %v617 = vld [vmem:[%s4 + $0x14] sm:$0xf]
        %v618 = vld [vmem:[%s4 + $0x18] sm:$0xf]
        %v619 = vld [vmem:[%s4 + $0x1c] sm:$0xf]
        %v620 = vld [vmem:[%s4 + $0x20] sm:$0xf]
        %v621 = vld [vmem:[%s4 + $0x24] sm:$0xf]
        %v622 = vld [vmem:[%s4 + $0x28] sm:$0xf]
        %v623 = vld [vmem:[%s4 + $0x2c] sm:$0xf]
        %v624 = vld [vmem:[%s4 + $0x30] sm:$0xf]
        %v625 = vld [vmem:[%s4 + $0x34] sm:$0xf]
        %v626 = vld [vmem:[%s4 + $0x38] sm:$0xf]
        %v627 = vld [vmem:[%s4 + $0x3c] sm:$0xf]
        %v632 = vunpack.c.l.b16 %v612
        %v633 = vunpack.c.l.b16 %v613
        %v634 = vunpack.c.l.b16 %v614
        %v635 = vunpack.c.l.b16 %v615
        %v636 = vpack.c.b16 %v633, %v632
        %v637 = vpack.c.b16 %v635, %v634
        %640 = vmatpush.bf16.msra.mxu0 0
        %641 = vmatpush.bf16.msra.mxu0 0
        %642 = vmatpush.bf16.msra.mxu0 0
        %643 = vmatpush.bf16.msra.mxu0 0
        %644 = vmatpush.bf16.msra.mxu0 0
        %645 = vmatpush.bf16.msra.mxu0 0
        %646 = vmatpush.bf16.msra.mxu0 %v637
        %647 = vmatpush.bf16.msra.mxu0 %v636
        %648 = vmatmul.bf16.gmra.mxu0 %v518
        %v649 = vpop.f32.mrf.mxu0
        %v650 = vadd.f32 0.0, %v649
        %v651 = vpop.f32.mrf.mxu0
        %652 = vdwg.mxu0
        %v657 = vunpack.c.l.b16 %v616
        %v658 = vunpack.c.l.b16 %v617
        %v659 = vunpack.c.l.b16 %v618
        %v660 = vunpack.c.l.b16 %v619
        %v661 = vpack.c.b16 %v658, %v657
        %v662 = vpack.c.b16 %v660, %v659
        %665 = vmatpush.bf16.msra.mxu0 0
        %666 = vmatpush.bf16.msra.mxu0 0
        %667 = vmatpush.bf16.msra.mxu0 0
        %668 = vmatpush.bf16.msra.mxu0 0
        %669 = vmatpush.bf16.msra.mxu0 0
        %670 = vmatpush.bf16.msra.mxu0 0
        %671 = vmatpush.bf16.msra.mxu0 %v662
        %672 = vmatpush.bf16.msra.mxu0 %v661
        %673 = vmatmul.bf16.gmra.mxu0 %v518
        %v674 = vpop.f32.mrf.mxu0
        %v675 = vadd.f32 0.0, %v674
        %v676 = vpop.f32.mrf.mxu0
        %677 = vdwg.mxu0
        %v682 = vunpack.c.l.b16 %v620
        %v683 = vunpack.c.l.b16 %v621
        %v684 = vunpack.c.l.b16 %v622
        %v685 = vunpack.c.l.b16 %v623
        %v686 = vpack.c.b16 %v683, %v682
        %v687 = vpack.c.b16 %v685, %v684
        %690 = vmatpush.bf16.msra.mxu0 0
        %691 = vmatpush.bf16.msra.mxu0 0
        %692 = vmatpush.bf16.msra.mxu0 0
        %693 = vmatpush.bf16.msra.mxu0 0
        %694 = vmatpush.bf16.msra.mxu0 0
        %695 = vmatpush.bf16.msra.mxu0 0
        %696 = vmatpush.bf16.msra.mxu0 %v687
        %697 = vmatpush.bf16.msra.mxu0 %v686
        %698 = vmatmul.bf16.gmra.mxu0 %v518
        %v699 = vpop.f32.mrf.mxu0
        %v700 = vadd.f32 0.0, %v699
        %v701 = vpop.f32.mrf.mxu0
        %702 = vdwg.mxu0
        %v707 = vunpack.c.l.b16 %v624
        %v708 = vunpack.c.l.b16 %v625
        %v709 = vunpack.c.l.b16 %v626
        %v710 = vunpack.c.l.b16 %v627
        %v711 = vpack.c.b16 %v708, %v707
        %v712 = vpack.c.b16 %v710, %v709
        %715 = vmatpush.bf16.msra.mxu0 0
        %716 = vmatpush.bf16.msra.mxu0 0
        %717 = vmatpush.bf16.msra.mxu0 0
        %718 = vmatpush.bf16.msra.mxu0 0
        %719 = vmatpush.bf16.msra.mxu0 0
        %720 = vmatpush.bf16.msra.mxu0 0
        %721 = vmatpush.bf16.msra.mxu0 %v712
        %722 = vmatpush.bf16.msra.mxu0 %v711
        %723 = vmatmul.bf16.gmra.mxu0 %v518
        %v724 = vpop.f32.mrf.mxu0
        %v725 = vadd.f32 0.0, %v724
        %v726 = vpop.f32.mrf.mxu0
        %727 = vdwg.mxu0
        %v728 = vpack.c.bf16 %v650, %v650
        %v729 = vpack.c.bf16 %v675, %v675
        %v730 = vpack.c.bf16 %v700, %v700
        %v731 = vpack.c.bf16 %v725, %v725
        %v732 = vld [vmem:[#allocation2] sm:$0xf]
        %v733 = vld [vmem:[#allocation2 + $0x4] sm:$0xf]
        %v734 = vld [vmem:[#allocation2 + $0x8] sm:$0xf]
        %v735 = vld [vmem:[#allocation2 + $0xc] sm:$0xf]
        %vm736 = vcmask 64512
        %v738 = vsel %vm736, %v732, 0
        %v741 = vsel %vm736, %v608, 0
        %743 = vmatpush.bf16.xpose.msra.mxu0 0
        %744 = vmatpush.bf16.xpose.msra.mxu0 0
        %745 = vmatpush.bf16.xpose.msra.mxu0 0
        %746 = vmatpush.bf16.xpose.msra.mxu0 0
        %747 = vmatpush.bf16.xpose.msra.mxu0 0
        %748 = vmatpush.bf16.xpose.msra.mxu0 0
        %749 = vmatpush.bf16.xpose.msra.mxu0 0
        %750 = vmatpush.bf16.xpose.msra.mxu0 %v741
        %751 = vmatmul.bf16.gmra.mxu0 %v738
        %v752 = vpop.f32.mrf.mxu0
        %v753 = vadd.f32 0.0, %v752
        %v754 = vpop.f32.mrf.mxu0
        %755 = vdwg.mxu0
        %v757 = vsel %vm736, %v733, 0
        %v760 = vsel %vm736, %v609, 0
        %762 = vmatpush.bf16.xpose.msra.mxu0 0
        %763 = vmatpush.bf16.xpose.msra.mxu0 0
        %764 = vmatpush.bf16.xpose.msra.mxu0 0
        %765 = vmatpush.bf16.xpose.msra.mxu0 0
        %766 = vmatpush.bf16.xpose.msra.mxu0 0
        %767 = vmatpush.bf16.xpose.msra.mxu0 0
        %768 = vmatpush.bf16.xpose.msra.mxu0 0
        %769 = vmatpush.bf16.xpose.msra.mxu0 %v760
        %770 = vmatmul.bf16.gmra.mxu0 %v757
        %v771 = vpop.f32.mrf.mxu0
        %v772 = vadd.f32 0.0, %v771
        %v773 = vpop.f32.mrf.mxu0
        %774 = vdwg.mxu0
        %v776 = vsel %vm736, %v734, 0
        %v779 = vsel %vm736, %v610, 0
        %781 = vmatpush.bf16.xpose.msra.mxu0 0
        %782 = vmatpush.bf16.xpose.msra.mxu0 0
        %783 = vmatpush.bf16.xpose.msra.mxu0 0
        %784 = vmatpush.bf16.xpose.msra.mxu0 0
        %785 = vmatpush.bf16.xpose.msra.mxu0 0
        %786 = vmatpush.bf16.xpose.msra.mxu0 0
        %787 = vmatpush.bf16.xpose.msra.mxu0 0
        %788 = vmatpush.bf16.xpose.msra.mxu0 %v779
        %789 = vmatmul.bf16.gmra.mxu0 %v776
        %v790 = vpop.f32.mrf.mxu0
        %v791 = vadd.f32 0.0, %v790
        %v792 = vpop.f32.mrf.mxu0
        %793 = vdwg.mxu0
        %v795 = vsel %vm736, %v735, 0
        %v798 = vsel %vm736, %v611, 0
        %800 = vmatpush.bf16.xpose.msra.mxu0 0
        %801 = vmatpush.bf16.xpose.msra.mxu0 0
        %802 = vmatpush.bf16.xpose.msra.mxu0 0
        %803 = vmatpush.bf16.xpose.msra.mxu0 0
        %804 = vmatpush.bf16.xpose.msra.mxu0 0
        %805 = vmatpush.bf16.xpose.msra.mxu0 0
        %806 = vmatpush.bf16.xpose.msra.mxu0 0
        %807 = vmatpush.bf16.xpose.msra.mxu0 %v798
        %808 = vmatmul.bf16.gmra.mxu0 %v795
        %v809 = vpop.f32.mrf.mxu0
        %v810 = vadd.f32 0.0, %v809
        %v811 = vpop.f32.mrf.mxu0
        %812 = vdwg.mxu0
        %v813 = vld [vmem:[#allocation3] sm:$0xff]
        %v814 = vld [vmem:[#allocation3 + $0x8] sm:$0xff]
        %v815 = vld [vmem:[#allocation3 + $0x10] sm:$0xff]
        %v816 = vld [vmem:[#allocation3 + $0x18] sm:$0xff]
        %v817 = vsel %vm736, %v753, -inf
        %818 = vmax.xlane.f32.xlu0 %v817
        %v819 = vpop.xlane.xlu0 %818
        %v820 = vsel %vm736, %v772, -inf
        %821 = vmax.xlane.f32.xlu0 %v820
        %v822 = vpop.xlane.xlu0 %821
        %v823 = vsel %vm736, %v791, -inf
        %824 = vmax.xlane.f32.xlu0 %v823
        %v825 = vpop.xlane.xlu0 %824
        %v826 = vsel %vm736, %v810, -inf
        %827 = vmax.xlane.f32.xlu0 %v826
        %v828 = vpop.xlane.xlu0 %827
        %v829 = vmax.f32 %v813, %v819
        %v830 = vmax.f32 %v814, %v822
        %v831 = vmax.f32 %v815, %v825
        %v832 = vmax.f32 %v816, %v828
        %v833 = vsub.f32 %v813, %v829
        %v834 = vsub.f32 %v814, %v830
        %v835 = vsub.f32 %v815, %v831
        %v836 = vsub.f32 %v816, %v832
        %v837 = vmul.f32 %v833, 1.442695
        %v838 = vpow.pop %v837
        %v839 = vmul.f32 %v834, 1.442695
        %v840 = vpow.pop %v839
        %v841 = vmul.f32 %v835, 1.442695
        %v842 = vpow.pop %v841
        %v843 = vmul.f32 %v836, 1.442695
        %v844 = vpow.pop %v843
        %846 = vset.pattern.permute.xlu0 0
        %847 = vperm.xlu0 %846, %v829
        %v848 = vpop.permute.xlu0 %847
        %851 = vset.pattern.permute.xlu0 0
        %852 = vperm.xlu0 %851, %v830
        %v853 = vpop.permute.xlu0 %852
        %856 = vset.pattern.permute.xlu0 0
        %857 = vperm.xlu0 %856, %v831
        %v858 = vpop.permute.xlu0 %857
        %861 = vset.pattern.permute.xlu0 0
        %862 = vperm.xlu0 %861, %v832
        %v863 = vpop.permute.xlu0 %862
        %v865 = vsub.f32 %v753, %v848
        %v866 = vsub.f32 %v772, %v853
        %v867 = vsub.f32 %v791, %v858
        %v868 = vsub.f32 %v810, %v863
        %v869 = vmul.f32 %v865, 1.442695
        %v870 = vpow.pop %v869
        %v871 = vmul.f32 %v866, 1.442695
        %v872 = vpow.pop %v871
        %v873 = vmul.f32 %v867, 1.442695
        %v874 = vpow.pop %v873
        %v875 = vmul.f32 %v868, 1.442695
        %v876 = vpow.pop %v875
        %v877 = vld [vmem:[#allocation4] sm:$0xff]
        %v878 = vld [vmem:[#allocation4 + $0x8] sm:$0xff]
        %v879 = vld [vmem:[#allocation4 + $0x10] sm:$0xff]
        %v880 = vld [vmem:[#allocation4 + $0x18] sm:$0xff]
        %v881 = vmul.f32 %v838, %v877
        %v882 = vmul.f32 %v840, %v878
        %v883 = vmul.f32 %v842, %v879
        %v884 = vmul.f32 %v844, %v880
        %v885 = vsel %vm736, %v870, 0.0
        %886 = vadd.xlane.f32.xlu0 %v885
        %v887 = vpop.xlane.xlu0 %886
        %v888 = vsel %vm736, %v872, 0.0
        %889 = vadd.xlane.f32.xlu0 %v888
        %v890 = vpop.xlane.xlu0 %889
        %v891 = vsel %vm736, %v874, 0.0
        %892 = vadd.xlane.f32.xlu0 %v891
        %v893 = vpop.xlane.xlu0 %892
        %v894 = vsel %vm736, %v876, 0.0
        %895 = vadd.xlane.f32.xlu0 %v894
        %v896 = vpop.xlane.xlu0 %895
        %v897 = vadd.f32 %v881, %v887
        %v898 = vadd.f32 %v882, %v890
        %v899 = vadd.f32 %v883, %v893
        %v900 = vadd.f32 %v884, %v896
        %vm901 = vcmask 7168
        %902 = vst.msk [vmem:[#allocation4] sm:$0xff] %vm901, %v897
        %903 = vst.msk [vmem:[#allocation4 + $0x8] sm:$0xff] %vm901, %v898
        %904 = vst.msk [vmem:[#allocation4 + $0x10] sm:$0xff] %vm901, %v899
        %905 = vst.msk [vmem:[#allocation4 + $0x18] sm:$0xff] %vm901, %v900
        %v906 = vld [vmem:[#allocation5] sm:$0xff]
        %v907 = vld [vmem:[#allocation5 + $0x8] sm:$0xff]
        %v908 = vld [vmem:[#allocation5 + $0x10] sm:$0xff]
        %v909 = vld [vmem:[#allocation5 + $0x18] sm:$0xff]
        %911 = vset.pattern.permute.xlu0 0
        %912 = vperm.xlu0 %911, %v838
        %v913 = vpop.permute.xlu0 %912
        %916 = vset.pattern.permute.xlu0 0
        %917 = vperm.xlu0 %916, %v840
        %v918 = vpop.permute.xlu0 %917
        %921 = vset.pattern.permute.xlu0 0
        %922 = vperm.xlu0 %921, %v842
        %v923 = vpop.permute.xlu0 %922
        %926 = vset.pattern.permute.xlu0 0
        %927 = vperm.xlu0 %926, %v844
        %v928 = vpop.permute.xlu0 %927
        %v930 = vmul.f32 %v913, %v906
        %v931 = vmul.f32 %v918, %v907
        %v932 = vmul.f32 %v923, %v908
        %v933 = vmul.f32 %v928, %v909
        %v934 = vpack.c.bf16 %v870, %v870
        %v935 = vpack.c.bf16 %v872, %v872
        %v936 = vpack.c.bf16 %v874, %v874
        %v937 = vpack.c.bf16 %v876, %v876
        %v939 = vsel %vm736, %v934, 0
        %vm941 = vcmask 1043456
        %v943 = vsel %vm941, %v728, 0
        %945 = vmatpush.bf16.msra.mxu0 0
        %946 = vmatpush.bf16.msra.mxu0 0
        %947 = vmatpush.bf16.msra.mxu0 0
        %948 = vmatpush.bf16.msra.mxu0 0
        %949 = vmatpush.bf16.msra.mxu0 0
        %950 = vmatpush.bf16.msra.mxu0 0
        %951 = vmatpush.bf16.msra.mxu0 0
        %952 = vmatpush.bf16.msra.mxu0 %v943
        %953 = vmatmul.bf16.gmra.mxu0 %v939
        %v954 = vpop.f32.mrf.mxu0
        %v955 = vadd.f32 0.0, %v954
        %v956 = vpop.f32.mrf.mxu0
        %957 = vdwg.mxu0
        %v959 = vsel %vm736, %v935, 0
        %v962 = vsel %vm941, %v729, 0
        %964 = vmatpush.bf16.msra.mxu0 0
        %965 = vmatpush.bf16.msra.mxu0 0
        %966 = vmatpush.bf16.msra.mxu0 0
        %967 = vmatpush.bf16.msra.mxu0 0
        %968 = vmatpush.bf16.msra.mxu0 0
        %969 = vmatpush.bf16.msra.mxu0 0
        %970 = vmatpush.bf16.msra.mxu0 0
        %971 = vmatpush.bf16.msra.mxu0 %v962
        %972 = vmatmul.bf16.gmra.mxu0 %v959
        %v973 = vpop.f32.mrf.mxu0
        %v974 = vadd.f32 0.0, %v973
        %v975 = vpop.f32.mrf.mxu0
        %976 = vdwg.mxu0
        %v978 = vsel %vm736, %v936, 0
        %v981 = vsel %vm941, %v730, 0
        %983 = vmatpush.bf16.msra.mxu0 0
        %984 = vmatpush.bf16.msra.mxu0 0
        %985 = vmatpush.bf16.msra.mxu0 0
        %986 = vmatpush.bf16.msra.mxu0 0
        %987 = vmatpush.bf16.msra.mxu0 0
        %988 = vmatpush.bf16.msra.mxu0 0
        %989 = vmatpush.bf16.msra.mxu0 0
        %990 = vmatpush.bf16.msra.mxu0 %v981
        %991 = vmatmul.bf16.gmra.mxu0 %v978
        %v992 = vpop.f32.mrf.mxu0
        %v993 = vadd.f32 0.0, %v992
        %v994 = vpop.f32.mrf.mxu0
        %995 = vdwg.mxu0
        %v997 = vsel %vm736, %v937, 0
        %v1000 = vsel %vm941, %v731, 0
        %1002 = vmatpush.bf16.msra.mxu0 0
        %1003 = vmatpush.bf16.msra.mxu0 0
        %1004 = vmatpush.bf16.msra.mxu0 0
        %1005 = vmatpush.bf16.msra.mxu0 0
        %1006 = vmatpush.bf16.msra.mxu0 0
        %1007 = vmatpush.bf16.msra.mxu0 0
        %1008 = vmatpush.bf16.msra.mxu0 0
        %1009 = vmatpush.bf16.msra.mxu0 %v1000
        %1010 = vmatmul.bf16.gmra.mxu0 %v997
        %v1011 = vpop.f32.mrf.mxu0
        %v1012 = vadd.f32 0.0, %v1011
        %v1013 = vpop.f32.mrf.mxu0
        %1014 = vdwg.mxu0
        %v1015 = vadd.f32 %v930, %v955
        %v1016 = vadd.f32 %v931, %v974
        %v1017 = vadd.f32 %v932, %v993
        %v1018 = vadd.f32 %v933, %v1012
        %1019 = vst.msk [vmem:[#allocation5] sm:$0xff] %vm736, %v1015
        %1020 = vst.msk [vmem:[#allocation5 + $0x8] sm:$0xff] %vm736, %v1016
        %1021 = vst.msk [vmem:[#allocation5 + $0x10] sm:$0xff] %vm736, %v1017
        %1022 = vst.msk [vmem:[#allocation5 + $0x18] sm:$0xff] %vm736, %v1018
        %1023 = vst.msk [vmem:[#allocation3] sm:$0xff] %vm901, %v829
        %1024 = vst.msk [vmem:[#allocation3 + $0x8] sm:$0xff] %vm901, %v830
        %1025 = vst.msk [vmem:[#allocation3 + $0x10] sm:$0xff] %vm901, %v831
        %1026 = vst.msk [vmem:[#allocation3 + $0x18] sm:$0xff] %vm901, %v832
        // Predicated region
        $region53: #{tpu_custom_call.1} parent=47 // pred_check
          %p1027 = pneg %p335
        $region54: #{tpu_custom_call.1} parent=47 // pred_check_branch
          %1029 = sbr.rel (%p1027) target = $region56
        $region55: #{tpu_custom_call.1} parent=47 // pred_region
          %v1030 = vld [vmem:[#allocation5] sm:$0xff]
          %v1031 = vld [vmem:[#allocation5 + $0x8] sm:$0xff]
          %v1032 = vld [vmem:[#allocation5 + $0x10] sm:$0xff]
          %v1033 = vld [vmem:[#allocation5 + $0x18] sm:$0xff]
          %v1034 = vld [vmem:[#allocation4] sm:$0xff]
          %v1035 = vld [vmem:[#allocation4 + $0x8] sm:$0xff]
          %v1036 = vld [vmem:[#allocation4 + $0x10] sm:$0xff]
          %v1037 = vld [vmem:[#allocation4 + $0x18] sm:$0xff]
          %v1038 = vrcp.pop %v1034
          %v1039 = vrcp.pop %v1035
          %v1040 = vrcp.pop %v1036
          %v1041 = vrcp.pop %v1037
          %1043 = vset.pattern.permute.xlu0 0
          %1044 = vperm.xlu0 %1043, %v1038
          %v1045 = vpop.permute.xlu0 %1044
          %1048 = vset.pattern.permute.xlu0 0
          %1049 = vperm.xlu0 %1048, %v1039
          %v1050 = vpop.permute.xlu0 %1049
          %1053 = vset.pattern.permute.xlu0 0
          %1054 = vperm.xlu0 %1053, %v1040
          %v1055 = vpop.permute.xlu0 %1054
          %1058 = vset.pattern.permute.xlu0 0
          %1059 = vperm.xlu0 %1058, %v1041
          %v1060 = vpop.permute.xlu0 %1059
          %v1062 = vmul.f32 %v1030, %v1045
          %v1063 = vmul.f32 %v1031, %v1050
          %v1064 = vmul.f32 %v1032, %v1055
          %v1065 = vmul.f32 %v1033, %v1060
          %v1066 = vpack.c.bf16 %v1062, %v1062
          %v1067 = vpack.c.bf16 %v1063, %v1063
          %v1068 = vpack.c.bf16 %v1064, %v1064
          %v1069 = vpack.c.bf16 %v1065, %v1065
          %v1070 = vld [vmem:[%s5] sm:$0xf]
          %v1071 = vld [vmem:[%s5 + $0x4] sm:$0xf]
          %v1072 = vld [vmem:[%s5 + $0x8] sm:$0xf]
          %v1073 = vld [vmem:[%s5 + $0xc] sm:$0xf]
          %v1075 = vsel %vm736, %v1066, 0
          %v1078 = vsel %vm941, %v1070, 0
          %1080 = vmatpush.bf16.msra.mxu0 0
          %1081 = vmatpush.bf16.msra.mxu0 0
          %1082 = vmatpush.bf16.msra.mxu0 0
          %1083 = vmatpush.bf16.msra.mxu0 0
          %1084 = vmatpush.bf16.msra.mxu0 0
          %1085 = vmatpush.bf16.msra.mxu0 0
          %1086 = vmatpush.bf16.msra.mxu0 0
          %1087 = vmatpush.bf16.msra.mxu0 %v1078
          %1088 = vmatmul.bf16.gmra.mxu0 %v1075
          %v1089 = vpop.f32.mrf.mxu0
          %v1090 = vadd.f32 0.0, %v1089
          %v1091 = vpop.f32.mrf.mxu0
          %1092 = vdwg.mxu0
          %v1094 = vsel %vm736, %v1067, 0
          %v1097 = vsel %vm941, %v1071, 0
          %1099 = vmatpush.bf16.msra.mxu0 0
          %1100 = vmatpush.bf16.msra.mxu0 0
          %1101 = vmatpush.bf16.msra.mxu0 0
          %1102 = vmatpush.bf16.msra.mxu0 0
          %1103 = vmatpush.bf16.msra.mxu0 0
          %1104 = vmatpush.bf16.msra.mxu0 0
          %1105 = vmatpush.bf16.msra.mxu0 0
          %1106 = vmatpush.bf16.msra.mxu0 %v1097
          %1107 = vmatmul.bf16.gmra.mxu0 %v1094
          %v1108 = vpop.f32.mrf.mxu0
          %v1109 = vadd.f32 0.0, %v1108
          %v1110 = vpop.f32.mrf.mxu0
          %1111 = vdwg.mxu0
          %v1113 = vsel %vm736, %v1068, 0
          %v1116 = vsel %vm941, %v1072, 0
          %1118 = vmatpush.bf16.msra.mxu0 0
          %1119 = vmatpush.bf16.msra.mxu0 0
          %1120 = vmatpush.bf16.msra.mxu0 0
          %1121 = vmatpush.bf16.msra.mxu0 0
          %1122 = vmatpush.bf16.msra.mxu0 0
          %1123 = vmatpush.bf16.msra.mxu0 0
          %1124 = vmatpush.bf16.msra.mxu0 0
          %1125 = vmatpush.bf16.msra.mxu0 %v1116
          %1126 = vmatmul.bf16.gmra.mxu0 %v1113
          %v1127 = vpop.f32.mrf.mxu0
          %v1128 = vadd.f32 0.0, %v1127
          %v1129 = vpop.f32.mrf.mxu0
          %1130 = vdwg.mxu0
          %v1132 = vsel %vm736, %v1069, 0
          %v1135 = vsel %vm941, %v1073, 0
          %1137 = vmatpush.bf16.msra.mxu0 0
          %1138 = vmatpush.bf16.msra.mxu0 0
          %1139 = vmatpush.bf16.msra.mxu0 0
          %1140 = vmatpush.bf16.msra.mxu0 0
          %1141 = vmatpush.bf16.msra.mxu0 0
          %1142 = vmatpush.bf16.msra.mxu0 0
          %1143 = vmatpush.bf16.msra.mxu0 0
          %1144 = vmatpush.bf16.msra.mxu0 %v1135
          %1145 = vmatmul.bf16.gmra.mxu0 %v1132
          %v1146 = vpop.f32.mrf.mxu0
          %v1147 = vadd.f32 0.0, %v1146
          %v1148 = vpop.f32.mrf.mxu0
          %1149 = vdwg.mxu0
          %v1150 = vsel %vm516, %v1090, 0.0
          %v1151 = vsel %vm516, %v1109, 0.0
          %v1152 = vadd.f32 %v1150, %v1151
          %v1153 = vsel %vm516, %v1128, 0.0
          %v1154 = vadd.f32 %v1152, %v1153
          %v1155 = vsel %vm516, %v1147, 0.0
          %v1156 = vadd.f32 %v1154, %v1155
          %v1157 = vld [vmem:[%s6] sm:$0x1]
          %v1159 = vperm.slane %v1157, 0
          %v1161 = vadd.f32 %v1156, %v1159
          %1162 = vst.msk [vmem:[%s319] sm:$0xff] %vm516, %v1161
        $region56: #{tpu_custom_call.1} parent=47 // pred_fallthru
          _
        %s1163 = sand.u32 %s211, 1
        %s1164 = scalar_lea.sflag [#allocation7], %s1163
        %s1165 = sand.u32 %s211, 1
        %s1166 = smul.addr %s1165, 8
        %s1167 = scalar_lea.vmem [#allocation6], %s1166
        // Predicated region
        $region57: #{tpu_custom_call.1} parent=47 // pred_check
          %p1168 = pneg %p221
        $region58: #{tpu_custom_call.1} parent=47 // pred_check_branch
          %1170 = sbr.rel (%p1168) target = $region60
        $region59: #{tpu_custom_call.1} parent=47 // pred_region
          %1172 = vsyncadd %s1164, 0
          %s1173 = sadd.s32 %s27, %s26
          %s1174 = smul.addr %s1173, 8
          %s1175 = scalar_lea.hbm %s7, %s1174
          %s1177 = sshll.u32 %s1167, 4
          %s1178 = int_to_ptr.vmem [resolvable:$true] %s1177
          %s1179 = sshll.u32 %s1175, 4
          %s1180 = int_to_ptr.hbm [resolvable:$true] %s1179
          %1182 = dma.vmem_to_hbm [thread:$0]  %s1178, 128, %s1180, %s1164
        $region60: #{tpu_custom_call.1} parent=47 // pred_fallthru
          _
      $region48: #{tpu_custom_call.1} parent=5 // pred_fallthru
        _
      %p1183 = scmp.le.s32.totalorder 2, %s16
      // Predicated region
      $region61: #{tpu_custom_call.1} parent=5 // pred_check
        %p1184 = pneg %p1183
      $region62: #{tpu_custom_call.1} parent=5 // pred_check_branch
        %1186 = sbr.rel (%p1184) target = $region64
      $region63: #{tpu_custom_call.1} parent=5 // pred_region
        %s1187 = ssub.s32 %s16, 2
        // Predicated region
        $region65: #{tpu_custom_call.1} parent=63 // pred_check
          %p1188 = pneg %p227
        $region66: #{tpu_custom_call.1} parent=63 // pred_check_branch
          %1190 = sbr.rel (%p1188) target = $region68
        $region67: #{tpu_custom_call.1} parent=63 // pred_region
          %s1191 = sand.u32 %s212, 1
          %s1192 = scalar_lea.sflag [#allocation7], %s1191
          %s1193 = sand.u32 %s212, 1
          %s1194 = smul.addr %s1193, 8
          %s1195 = scalar_lea.vmem [#allocation6], %s1194
          %1197 = dma.done %s1192, 128
        $region68: #{tpu_custom_call.1} parent=63 // pred_fallthru
          _
      $region64: #{tpu_custom_call.1} parent=5 // pred_fallthru
        _
    $region6: #{tpu_custom_call.1} parent=1 // loop_footer
      %s20 = sadd.s32 1, %s16
    $region7: #{tpu_custom_call.1} parent=1 // loop_footer_branch
      %15 = sbr.rel target = $region3
    $region8: #{tpu_custom_call.1} parent=1 // loop_exit
      _
    %1198 = vsyncpa [#allocation7], 1
    %s1199 = scalar_lea.sflag [#allocation7], 1
    %1200 = vsyncpa %s1199, 1

</llo_original>
